<compile_context>
chip_gen: v6e
topology: v6e:2x2x1
jax: 0.10.0
libtpu: 0.0.40
codegen_flags: <defaults>
</compile_context>

<pallas_src>
import functools

import jax
import jax.numpy as jnp
from jax import lax
from jax.experimental import pallas as pl
from jax.experimental.pallas import tpu as pltpu


def _round_up(x, m):
    return (x + m - 1) // m * m


def _dice_kernel(painted_ref, tgt_ref, inter_out_ref, union_out_ref,
                 inter_acc, union_acc, *, n_chunks, chunk_w):
    """One (8, tile_l) pixel tile per grid step.

    painted_ref/tgt_ref : (8, tile_l) int32 labels (padded pixels are -1)
    inter_out/union_out : (c_pad, cw)    f32 outputs, written at the last step
    inter_acc/union_acc : (c_pad, 8, cw) f32 VMEM scratch accumulators
    """
    i = pl.program_id(0)

    @pl.when(i == 0)
    def _init():
        inter_acc[...] = jnp.zeros_like(inter_acc)
        union_acc[...] = jnp.zeros_like(union_acc)

    c_pad, r, cw = inter_acc.shape
    # Hoisted once per grid step (JAX does not CSE broadcast_in_dim).
    c_iota = lax.broadcasted_iota(jnp.int32, (c_pad, r, cw), 0)

    def chunk(j, carry):
        off = pl.multiple_of(j * chunk_w, chunk_w)
        p = painted_ref[:, pl.ds(off, chunk_w)]                     # (8, cw)
        t = tgt_ref[:, pl.ds(off, chunk_w)]                         # (8, cw)
        pred_oh = (p[None, :, :] == c_iota).astype(jnp.float32)     # (c_pad,8,cw)
        tgt_oh = (t[None, :, :] == c_iota).astype(jnp.float32)      # (c_pad,8,cw)
        inter_acc[...] += pred_oh * tgt_oh
        union_acc[...] += pred_oh + tgt_oh                          # fused union
        return carry

    lax.fori_loop(0, n_chunks, chunk, 0, unroll=True)

    @pl.when(i == pl.num_programs(0) - 1)
    def _finalize():
        # Single cross-sublane reduce -> small lane-dense (c_pad, cw) outputs.
        inter_out_ref[...] = jnp.sum(inter_acc[...], axis=1)
        union_out_ref[...] = jnp.sum(union_acc[...], axis=1)


def dice_loss(output, target, segments, *, tile_l_target=8192):
    """output: (V, F) float logits; target/segments: (N, N) int labels."""
    n_vertex, n_class = output.shape
    n0, n1 = target.shape
    n_pix = n0 * n1

    # ---- vertex argmax + superpixel paint (cheap, done once in XLA) ----
    pred = jnp.argmax(jnp.asarray(output, jnp.float32), axis=1).astype(jnp.int32)
    seg = jnp.asarray(segments, jnp.int32)
    valid = (seg >= 0) & (seg < n_vertex)
    painted = jnp.where(valid, pred[jnp.clip(seg, 0, n_vertex - 1)], 0)
    tgt = jnp.asarray(target, jnp.int32)

    # ---- tiling: 8-sublane pixel slab, large lane tiles, 512-lane sub-chunks ----
    r = 8
    tl_min = _round_up(pl.cdiv(n_pix, r), 128)
    tile_l = min(tl_min, max(128, _round_up(tile_l_target, 128)))
    cw = min(512, tile_l)                       # sub-chunk lane width
    tile_l = _round_up(tile_l, cw)              # multiple of cw (and of 128)
    n_chunks = tile_l // cw
    pix_per_block = r * tile_l
    n_blocks = pl.cdiv(n_pix, pix_per_block)
    n_pad = n_blocks * pix_per_block
    c_pad = _round_up(n_class, 8)

    pad = n_pad - n_pix
    painted3d = jnp.pad(painted.reshape(-1), (0, pad),
                        constant_values=-1).reshape(n_blocks, r, tile_l)
    tgt3d = jnp.pad(tgt.reshape(-1), (0, pad),
                    constant_values=-1).reshape(n_blocks, r, tile_l)

    in_spec = pl.BlockSpec((None, r, tile_l), lambda i: (i, 0, 0))
    out_spec = pl.BlockSpec((c_pad, cw), lambda i: (0, 0))
    out_shape = jax.ShapeDtypeStruct((c_pad, cw), jnp.float32)

    # VMEM budget: double-buffered label tiles + 2 scratch accumulators + outputs.
    vmem_bytes = (2 * 2 * r * tile_l * 4
                  + 2 * c_pad * r * cw * 4
                  + 2 * 2 * c_pad * cw * 4)
    vmem_limit = int(min(48 << 20, max(16 << 20, 2 * vmem_bytes)))

    kernel = functools.partial(_dice_kernel, n_chunks=n_chunks, chunk_w=cw)

    inter_p, union_p = pl.pallas_call(
        kernel,
        out_shape=(out_shape, out_shape),
        grid_spec=pltpu.PrefetchScalarGridSpec(
            num_scalar_prefetch=0,
            grid=(n_blocks,),
            in_specs=[in_spec, in_spec],
            out_specs=(out_spec, out_spec),
            scratch_shapes=[pltpu.VMEM((c_pad, r, cw), jnp.float32),
                            pltpu.VMEM((c_pad, r, cw), jnp.float32)]),
        compiler_params=pltpu.CompilerParams(
            dimension_semantics=("arbitrary",),
            vmem_limit_bytes=vmem_limit),
    )(painted3d, tgt3d)

    # Tiny finalize: cross-lane reduce of (c_pad, cw) partials + dice.
    inter = jnp.sum(inter_p, axis=1)[:n_class]
    union = jnp.sum(union_p, axis=1)[:n_class]
    score = 2.0 * inter / (union + 1e-10)
    return 1.0 - jnp.mean(score)


def dice_loss_ref(output, target, segments):
    """Pure-JAX reference mirroring the PyTorch forward."""
    n_vertex, n_class = output.shape
    pred = jnp.argmax(output, axis=1)
    valid = (segments >= 0) & (segments < n_vertex)
    painted = jnp.where(valid, pred[jnp.clip(segments, 0, n_vertex - 1)], 0)
    pred_oh = jax.nn.one_hot(painted, n_class, axis=0, dtype=jnp.float32)
    tgt_oh = jax.nn.one_hot(target, n_class, axis=0, dtype=jnp.float32)
    inter = 2.0 * jnp.sum(pred_oh * tgt_oh, axis=(1, 2))
    union = jnp.sum(pred_oh ** 2, axis=(1, 2)) + jnp.sum(tgt_oh ** 2, axis=(1, 2))
    score = inter / (union + 1e-10)
    return 1.0 - jnp.mean(score)


if __name__ == "__main__":
    key = jax.random.PRNGKey(0)
    k1, k2, k3, k4, k5, k6 = jax.random.split(key, 6)

    # Case 1: tiny shapes (single block, single sub-chunk).
    V, C, N = 8, 4, 16
    output = jax.random.normal(k1, (V, C), dtype=jnp.float32)
    target = jax.random.randint(k2, (N, N), 0, C, dtype=jnp.int32)
    segments = jax.random.randint(k3, (N, N), 0, V, dtype=jnp.int32)
    loss = dice_loss(output, target, segments)
    jax.block_until_ready(loss)
    ref = dice_loss_ref(output, target, segments)
    assert jnp.allclose(loss, ref, atol=1e-5), (loss, ref)

    # Case 2: single block, multiple in-kernel sub-chunks, -1 padding path,
    # some segment ids >= V (kept label 0, as in the original loop bound).
    V2, C2, N2 = 100, 5, 80
    output2 = jax.random.normal(k4, (V2, C2), dtype=jnp.float32)
    target2 = jax.random.randint(k5, (N2, N2), 0, C2, dtype=jnp.int32)
    segments2 = jax.random.randint(k6, (N2, N2), 0, V2 + 8, dtype=jnp.int32)
    loss2 = dice_loss(output2, target2, segments2)
    jax.block_until_ready(loss2)
    ref2 = dice_loss_ref(output2, target2, segments2)
    assert jnp.allclose(loss2, ref2, atol=1e-5), (loss2, ref2)

    # Case 3: force multiple grid blocks (accumulate across steps + last-step
    # finalize) by shrinking the lane tile.
    loss3 = dice_loss(output2, target2, segments2, tile_l_target=256)
    jax.block_until_ready(loss3)
    assert jnp.allclose(loss3, ref2, atol=1e-5), (loss3, ref2)

    print("KERNEL_OK")
</pallas_src>

<mosaic_0001>
module attributes {stable_mosaic.version = 11 : i64} {
  func.func @_dice_kernel(%arg0: i32, %arg1: memref<1x8x128xi32, #tpu.memory_space<vmem>>, %arg2: memref<1x8x128xi32, #tpu.memory_space<vmem>>, %arg3: memref<8x128xf32, #tpu.memory_space<vmem>>, %arg4: memref<8x128xf32, #tpu.memory_space<vmem>>, %arg5: memref<8x8x128xf32, #tpu.memory_space<vmem>>, %arg6: memref<8x8x128xf32, #tpu.memory_space<vmem>>) attributes {dimension_semantics = [#tpu.dimension_semantics<arbitrary>], iteration_bounds = array<i64: 1>, scalar_prefetch = 0 : i64, scratch_operands = 2 : i64, tpu.core_type = #tpu.core_type<tc>, window_params = [{transform_indices = @transform_0, window_bounds = array<i64: 1, 8, 128>}, {transform_indices = @transform_1, window_bounds = array<i64: 1, 8, 128>}, {pipeline_mode = #tpu.pipeline_mode<synchronous>, transform_indices = @transform_2, window_bounds = array<i64: 8, 128>}, {pipeline_mode = #tpu.pipeline_mode<synchronous>, transform_indices = @transform_3, window_bounds = array<i64: 8, 128>}]} {
    %c0_i32 = arith.constant 0 : i32
    %0 = arith.cmpi eq, %arg0, %c0_i32 : i32
    %1 = arith.extui %0 : i1 to i32
    %c0_i32_0 = arith.constant 0 : i32
    %2 = arith.cmpi ne, %1, %c0_i32_0 : i32
    scf.if %2 {
      %cst = arith.constant 0.000000e+00 : f32
      %33 = vector.broadcast %cst : f32 to vector<8x8x128xf32>
      %c0_19 = arith.constant 0 : index
      %c0_20 = arith.constant 0 : index
      %c0_21 = arith.constant 0 : index
      %34 = vector.load %arg5[%c0_19, %c0_20, %c0_21] : memref<8x8x128xf32, #tpu.memory_space<vmem>>, vector<8x8x128xf32>
      tpu.vector_store %arg5[%c0_19, %c0_20, %c0_21], %33 {strides = array<i32>} : memref<8x8x128xf32, #tpu.memory_space<vmem>>, vector<8x8x128xf32>,
      %cst_22 = arith.constant 0.000000e+00 : f32
      %35 = vector.broadcast %cst_22 : f32 to vector<8x8x128xf32>
      %c0_23 = arith.constant 0 : index
      %c0_24 = arith.constant 0 : index
      %c0_25 = arith.constant 0 : index
      %36 = vector.load %arg6[%c0_23, %c0_24, %c0_25] : memref<8x8x128xf32, #tpu.memory_space<vmem>>, vector<8x8x128xf32>
      tpu.vector_store %arg6[%c0_23, %c0_24, %c0_25], %35 {strides = array<i32>} : memref<8x8x128xf32, #tpu.memory_space<vmem>>, vector<8x8x128xf32>,
    } else {
    }
    %3 = tpu.iota {dimensions = array<i32: 0>} : vector<8x8x128xi32>
    %c0_i32_1 = arith.constant 0 : i32
    %c128_i32 = arith.constant 128 : i32
    %4 = arith.muli %c0_i32_1, %c128_i32 : i32
    %5 = tpu.assume_multiple %4, 128 : i32
    %c0 = arith.constant 0 : index
    %c0_2 = arith.constant 0 : index
    %6 = arith.index_cast %5 : i32 to index
    %7 = vector.load %arg1[%c0, %c0_2, %6] : memref<1x8x128xi32, #tpu.memory_space<vmem>>, vector<1x8x128xi32>
    %8 = vector.shape_cast %7 : vector<1x8x128xi32> to vector<8x128xi32>
    %c0_3 = arith.constant 0 : index
    %c0_4 = arith.constant 0 : index
    %9 = arith.index_cast %5 : i32 to index
    %10 = vector.load %arg2[%c0_3, %c0_4, %9] : memref<1x8x128xi32, #tpu.memory_space<vmem>>, vector<1x8x128xi32>
    %11 = vector.shape_cast %10 : vector<1x8x128xi32> to vector<8x128xi32>
    %12 = vector.shape_cast %8 : vector<8x128xi32> to vector<1x8x128xi32>
    %13 = vector.broadcast %12 : vector<1x8x128xi32> to vector<8x8x128xi32>
    %14 = arith.cmpi eq, %13, %3 : vector<8x8x128xi32>
    %15 = arith.extui %14 : vector<8x8x128xi1> to vector<8x8x128xi32>
    %16 = arith.sitofp %15 : vector<8x8x128xi32> to vector<8x8x128xf32>
    %17 = vector.shape_cast %11 : vector<8x128xi32> to vector<1x8x128xi32>
    %18 = vector.broadcast %17 : vector<1x8x128xi32> to vector<8x8x128xi32>
    %19 = arith.cmpi eq, %18, %3 : vector<8x8x128xi32>
    %20 = arith.extui %19 : vector<8x8x128xi1> to vector<8x8x128xi32>
    %21 = arith.sitofp %20 : vector<8x8x128xi32> to vector<8x8x128xf32>
    %c0_5 = arith.constant 0 : index
    %c0_6 = arith.constant 0 : index
    %c0_7 = arith.constant 0 : index
    %22 = vector.load %arg5[%c0_5, %c0_6, %c0_7] : memref<8x8x128xf32, #tpu.memory_space<vmem>>, vector<8x8x128xf32>
    %23 = arith.mulf %16, %21 : vector<8x8x128xf32>
    %24 = arith.addf %22, %23 : vector<8x8x128xf32>
    %c0_8 = arith.constant 0 : index
    %c0_9 = arith.constant 0 : index
    %c0_10 = arith.constant 0 : index
    %25 = vector.load %arg5[%c0_8, %c0_9, %c0_10] : memref<8x8x128xf32, #tpu.memory_space<vmem>>, vector<8x8x128xf32>
    tpu.vector_store %arg5[%c0_8, %c0_9, %c0_10], %24 {strides = array<i32>} : memref<8x8x128xf32, #tpu.memory_space<vmem>>, vector<8x8x128xf32>,
    %c0_11 = arith.constant 0 : index
    %c0_12 = arith.constant 0 : index
    %c0_13 = arith.constant 0 : index
    %26 = vector.load %arg6[%c0_11, %c0_12, %c0_13] : memref<8x8x128xf32, #tpu.memory_space<vmem>>, vector<8x8x128xf32>
    %27 = arith.addf %16, %21 : vector<8x8x128xf32>
    %28 = arith.addf %26, %27 : vector<8x8x128xf32>
    %c0_14 = arith.constant 0 : index
    %c0_15 = arith.constant 0 : index
    %c0_16 = arith.constant 0 : index
    %29 = vector.load %arg6[%c0_14, %c0_15, %c0_16] : memref<8x8x128xf32, #tpu.memory_space<vmem>>, vector<8x8x128xf32>
    tpu.vector_store %arg6[%c0_14, %c0_15, %c0_16], %28 {strides = array<i32>} : memref<8x8x128xf32, #tpu.memory_space<vmem>>, vector<8x8x128xf32>,
    %c1_i32 = arith.constant 1 : i32
    %c0_i32_17 = arith.constant 0 : i32
    %30 = arith.cmpi eq, %arg0, %c0_i32_17 : i32
    %31 = arith.extui %30 : i1 to i32
    %c0_i32_18 = arith.constant 0 : i32
    %32 = arith.cmpi ne, %31, %c0_i32_18 : i32
    scf.if %32 {
      %c0_19 = arith.constant 0 : index
      %c0_20 = arith.constant 0 : index
      %c0_21 = arith.constant 0 : index
      %33 = vector.load %arg5[%c0_19, %c0_20, %c0_21] : memref<8x8x128xf32, #tpu.memory_space<vmem>>, vector<8x8x128xf32>
      %cst = arith.constant dense<0.000000e+00> : vector<8x128xf32>
      %34 = vector.multi_reduction <add>, %33, %cst [1] : vector<8x8x128xf32> to vector<8x128xf32>
      %c0_22 = arith.constant 0 : index
      %c0_23 = arith.constant 0 : index
      %35 = vector.load %arg3[%c0_22, %c0_23] : memref<8x128xf32, #tpu.memory_space<vmem>>, vector<8x128xf32>
      tpu.vector_store %arg3[%c0_22, %c0_23], %34 {strides = array<i32>} : memref<8x128xf32, #tpu.memory_space<vmem>>, vector<8x128xf32>,
      %c0_24 = arith.constant 0 : index
      %c0_25 = arith.constant 0 : index
      %c0_26 = arith.constant 0 : index
      %36 = vector.load %arg6[%c0_24, %c0_25, %c0_26] : memref<8x8x128xf32, #tpu.memory_space<vmem>>, vector<8x8x128xf32>
      %cst_27 = arith.constant dense<0.000000e+00> : vector<8x128xf32>
      %37 = vector.multi_reduction <add>, %36, %cst_27 [1] : vector<8x8x128xf32> to vector<8x128xf32>
      %c0_28 = arith.constant 0 : index
      %c0_29 = arith.constant 0 : index
      %38 = vector.load %arg4[%c0_28, %c0_29] : memref<8x128xf32, #tpu.memory_space<vmem>>, vector<8x128xf32>
      tpu.vector_store %arg4[%c0_28, %c0_29], %37 {strides = array<i32>} : memref<8x128xf32, #tpu.memory_space<vmem>>, vector<8x128xf32>,
    } else {
    }
    return
  }
  func.func @transform_0(%arg0: i32) -> (i32, i32, i32) {
    %c0_i32 = arith.constant 0 : i32
    %c0_i32_0 = arith.constant 0 : i32
    %c0_i32_1 = arith.constant 0 : i32
    return %arg0, %c0_i32, %c0_i32_0 : i32, i32, i32
  }
  func.func @transform_1(%arg0: i32) -> (i32, i32, i32) {
    %c0_i32 = arith.constant 0 : i32
    %c0_i32_0 = arith.constant 0 : i32
    %c0_i32_1 = arith.constant 0 : i32
    return %arg0, %c0_i32, %c0_i32_0 : i32, i32, i32
  }
  func.func @transform_2(%arg0: i32) -> (i32, i32) {
    %c0_i32 = arith.constant 0 : i32
    %c0_i32_0 = arith.constant 0 : i32
    %c0_i32_1 = arith.constant 0 : i32
    return %c0_i32, %c0_i32_0 : i32, i32
  }
  func.func @transform_3(%arg0: i32) -> (i32, i32) {
    %c0_i32 = arith.constant 0 : i32
    %c0_i32_0 = arith.constant 0 : i32
    %c0_i32_1 = arith.constant 0 : i32
    return %c0_i32, %c0_i32_0 : i32, i32
  }
}

</mosaic_0001>

<llo_original>
// kernel: tpu_custom_call.1
$region0: #{tpu_custom_call.1}
  #allocation0 [shape = 'u32[]', space=smem, size = 0x4, offset = 0x4, fixed_abs, tag = 'smem constant byte address 0x4 - core index']
  #allocation1 [shape = 'u32[144,128]{1,0:T(1,128)}', space=vmem, size = 0x12000, scoped, tag = 'internal scratch']
  #allocation2 [shape = 'f32[8,8,128]{2,1,0:T(8,128)}', space=vmem, size = 0x8000, scoped, tag = 'scratch operand']
  #allocation3 [shape = 'f32[8,8,128]{2,1,0:T(8,128)}', space=vmem, size = 0x8000, scoped, tag = 'scratch operand']
  %s0 = inlined_call_operand.hbm [shape: s32[1,8,128], index: 0, kind: input, shape index: {}]
  %s1 = inlined_call_operand.hbm [shape: s32[1,8,128], index: 1, kind: input, shape index: {}]
  %s2 = inlined_call_operand.hbm [shape: f32[8,128], index: 2, kind: output, shape index: {0}]
  %s3 = inlined_call_operand.hbm [shape: f32[8,128], index: 3, kind: output, shape index: {1}]
  %4 = xla_tuple %s2, %s3
  %s5 = sld [smem:[#allocation0]]
  $region42: #{tpu_custom_call.1} parent=0
    _
  %s7 = ssub.s32 1, %s5
  %s8 = scalar_select 0, %s7, %s5
  $region1: #{tpu_custom_call.1} parent=0
    #allocation4 [shape = 'u8[4096]{0}', space=vmem, size = 0x1000, scoped, tag = 'input window, operand 0, single buffered']
    #allocation5 [shape = 's32[1]{0}', space=sflag, size = 0x4, scoped, tag = 'scoped memory for tpu_custom_call.1']
    #allocation6 [shape = 's32[1]{0}', space=sflag, size = 0x4, scoped, tag = 'scoped memory for tpu_custom_call.1']
    #allocation7 [shape = 'u8[4096]{0}', space=vmem, size = 0x1000, scoped, tag = 'input window, operand 1, single buffered']
    #allocation8 [shape = 's32[1]{0}', space=sflag, size = 0x4, scoped, tag = 'scoped memory for tpu_custom_call.1']
    #allocation9 [shape = 'u8[4096]{0}', space=vmem, size = 0x1000, scoped, tag = 'output window, operand 0, single buffered']
    #allocation10 [shape = 'u8[4096]{0}', space=vmem, size = 0x1000, scoped, tag = 'output window, operand 1, single buffered']
    #allocation11 [shape = 's32[1]{0}', space=sflag, size = 0x4, scoped, tag = 'scoped memory for tpu_custom_call.1']
    %9 = vsyncpa [#allocation5], 0
    %10 = vsyncpa [#allocation8], 0
    %11 = vsyncpa [#allocation6], 0
    %12 = vsyncpa [#allocation11], 0
    // Predicated region
    $region2: #{tpu_custom_call.1} parent=1 // pred_check
      _
    $region3: #{tpu_custom_call.1} parent=1 // pred_check_branch
      %14 = sbr.rel (0) target = $region5
    $region4: #{tpu_custom_call.1} parent=1 // pred_region
      %s16 = ssub.s32 128, 128
      %17 = vsyncadd [#allocation5], %s16
      %s19 = sshll.u32 [#allocation4], 4
      %s20 = int_to_ptr.vmem [resolvable:$true] %s19
      %22 = dma.hbm_to_vmem [thread:$0]  %s0, 128, %s20, [#allocation5]
    $region5: #{tpu_custom_call.1} parent=1 // pred_fallthru
      _
    // Predicated region
    $region6: #{tpu_custom_call.1} parent=1 // pred_check
      _
    $region7: #{tpu_custom_call.1} parent=1 // pred_check_branch
      %24 = sbr.rel (0) target = $region9
    $region8: #{tpu_custom_call.1} parent=1 // pred_region
      %s26 = ssub.s32 128, 128
      %27 = vsyncadd [#allocation8], %s26
      %s29 = sshll.u32 [#allocation7], 4
      %s30 = int_to_ptr.vmem [resolvable:$true] %s29
      %32 = dma.hbm_to_vmem [thread:$0]  %s1, 128, %s30, [#allocation8]
    $region9: #{tpu_custom_call.1} parent=1 // pred_fallthru
      _
    // Predicated region
    $region10: #{tpu_custom_call.1} parent=1 // pred_check
      _
    $region11: #{tpu_custom_call.1} parent=1 // pred_check_branch
      %34 = sbr.rel (0) target = $region13
    $region12: #{tpu_custom_call.1} parent=1 // pred_region
      %35 = dma.done [#allocation5], 128
    $region13: #{tpu_custom_call.1} parent=1 // pred_fallthru
      _
    // Predicated region
    $region14: #{tpu_custom_call.1} parent=1 // pred_check
      _
    $region15: #{tpu_custom_call.1} parent=1 // pred_check_branch
      %37 = sbr.rel (0) target = $region17
    $region16: #{tpu_custom_call.1} parent=1 // pred_region
      %38 = dma.done [#allocation8], 128
    $region17: #{tpu_custom_call.1} parent=1 // pred_fallthru
      _
    %p39 = scmp.eq.s32.totalorder 0, 0
    // Predicated region
    $region18: #{tpu_custom_call.1} parent=1 // pred_check
      %p40 = pneg %p39
    $region19: #{tpu_custom_call.1} parent=1 // pred_check_branch
      %42 = sbr.rel (%p40) target = $region21
    $region20: #{tpu_custom_call.1} parent=1 // pred_region
      %43 = vst [vmem:[#allocation2] sm:$0xff] 0.0
      %44 = vst [vmem:[#allocation2 + $0x8] sm:$0xff] 0.0
      %45 = vst [vmem:[#allocation2 + $0x10] sm:$0xff] 0.0
      %46 = vst [vmem:[#allocation2 + $0x18] sm:$0xff] 0.0
      %47 = vst [vmem:[#allocation2 + $0x20] sm:$0xff] 0.0
      %48 = vst [vmem:[#allocation2 + $0x28] sm:$0xff] 0.0
      %49 = vst [vmem:[#allocation2 + $0x30] sm:$0xff] 0.0
      %50 = vst [vmem:[#allocation2 + $0x38] sm:$0xff] 0.0
      %51 = vst [vmem:[#allocation3] sm:$0xff] 0.0
      %52 = vst [vmem:[#allocation3 + $0x8] sm:$0xff] 0.0
      %53 = vst [vmem:[#allocation3 + $0x10] sm:$0xff] 0.0
      %54 = vst [vmem:[#allocation3 + $0x18] sm:$0xff] 0.0
      %55 = vst [vmem:[#allocation3 + $0x20] sm:$0xff] 0.0
      %56 = vst [vmem:[#allocation3 + $0x28] sm:$0xff] 0.0
      %57 = vst [vmem:[#allocation3 + $0x30] sm:$0xff] 0.0
      %58 = vst [vmem:[#allocation3 + $0x38] sm:$0xff] 0.0
    $region21: #{tpu_custom_call.1} parent=1 // pred_fallthru
      _
    %v59 = vld [vmem:[#allocation4] sm:$0xff]
    %v60 = vld [vmem:[#allocation7] sm:$0xff]
    %vm61 = vcmp.eq.s32.totalorder %v59, 0
    %vm62 = vcmp.eq.s32.totalorder %v59, 1
    %vm63 = vcmp.eq.s32.totalorder %v59, 2
    %vm64 = vcmp.eq.s32.totalorder %v59, 3
    %vm65 = vcmp.eq.s32.totalorder %v59, 4
    %vm66 = vcmp.eq.s32.totalorder %v59, 5
    %vm67 = vcmp.eq.s32.totalorder %v59, 6
    %vm68 = vcmp.eq.s32.totalorder %v59, 7
    %v69 = vsel %vm61, 1, 0
    %v70 = vsel %vm62, 1, 0
    %v71 = vsel %vm63, 1, 0
    %v72 = vsel %vm64, 1, 0
    %v73 = vsel %vm65, 1, 0
    %v74 = vsel %vm66, 1, 0
    %v75 = vsel %vm67, 1, 0
    %v76 = vsel %vm68, 1, 0
    %v77 = vcvt.s32.f32 %v69
    %v78 = vcvt.s32.f32 %v70
    %v79 = vcvt.s32.f32 %v71
    %v80 = vcvt.s32.f32 %v72
    %v81 = vcvt.s32.f32 %v73
    %v82 = vcvt.s32.f32 %v74
    %v83 = vcvt.s32.f32 %v75
    %v84 = vcvt.s32.f32 %v76
    %vm85 = vcmp.eq.s32.totalorder %v60, 0
    %vm86 = vcmp.eq.s32.totalorder %v60, 1
    %vm87 = vcmp.eq.s32.totalorder %v60, 2
    %vm88 = vcmp.eq.s32.totalorder %v60, 3
    %vm89 = vcmp.eq.s32.totalorder %v60, 4
    %vm90 = vcmp.eq.s32.totalorder %v60, 5
    %vm91 = vcmp.eq.s32.totalorder %v60, 6
    %vm92 = vcmp.eq.s32.totalorder %v60, 7
    %v93 = vsel %vm85, 1, 0
    %v94 = vsel %vm86, 1, 0
    %v95 = vsel %vm87, 1, 0
    %v96 = vsel %vm88, 1, 0
    %v97 = vsel %vm89, 1, 0
    %v98 = vsel %vm90, 1, 0
    %v99 = vsel %vm91, 1, 0
    %v100 = vsel %vm92, 1, 0
    %v101 = vcvt.s32.f32 %v93
    %v102 = vcvt.s32.f32 %v94
    %v103 = vcvt.s32.f32 %v95
    %v104 = vcvt.s32.f32 %v96
    %v105 = vcvt.s32.f32 %v97
    %v106 = vcvt.s32.f32 %v98
    %v107 = vcvt.s32.f32 %v99
    %v108 = vcvt.s32.f32 %v100
    %v109 = vld [vmem:[#allocation2] sm:$0xff]
    %v110 = vld [vmem:[#allocation2 + $0x8] sm:$0xff]
    %v111 = vld [vmem:[#allocation2 + $0x10] sm:$0xff]
    %v112 = vld [vmem:[#allocation2 + $0x18] sm:$0xff]
    %v113 = vld [vmem:[#allocation2 + $0x20] sm:$0xff]
    %v114 = vld [vmem:[#allocation2 + $0x28] sm:$0xff]
    %v115 = vld [vmem:[#allocation2 + $0x30] sm:$0xff]
    %v116 = vld [vmem:[#allocation2 + $0x38] sm:$0xff]
    %v117 = vmul.f32 %v77, %v101
    %v118 = vmul.f32 %v78, %v102
    %v119 = vmul.f32 %v79, %v103
    %v120 = vmul.f32 %v80, %v104
    %v121 = vmul.f32 %v81, %v105
    %v122 = vmul.f32 %v82, %v106
    %v123 = vmul.f32 %v83, %v107
    %v124 = vmul.f32 %v84, %v108
    %v125 = vadd.f32 %v109, %v117
    %v126 = vadd.f32 %v110, %v118
    %v127 = vadd.f32 %v111, %v119
    %v128 = vadd.f32 %v112, %v120
    %v129 = vadd.f32 %v113, %v121
    %v130 = vadd.f32 %v114, %v122
    %v131 = vadd.f32 %v115, %v123
    %v132 = vadd.f32 %v116, %v124
    %133 = vst [vmem:[#allocation2] sm:$0xff] %v125
    %134 = vst [vmem:[#allocation2 + $0x8] sm:$0xff] %v126
    %135 = vst [vmem:[#allocation2 + $0x10] sm:$0xff] %v127
    %136 = vst [vmem:[#allocation2 + $0x18] sm:$0xff] %v128
    %137 = vst [vmem:[#allocation2 + $0x20] sm:$0xff] %v129
    %138 = vst [vmem:[#allocation2 + $0x28] sm:$0xff] %v130
    %139 = vst [vmem:[#allocation2 + $0x30] sm:$0xff] %v131
    %140 = vst [vmem:[#allocation2 + $0x38] sm:$0xff] %v132
    %v141 = vld [vmem:[#allocation3] sm:$0xff]
    %v142 = vld [vmem:[#allocation3 + $0x8] sm:$0xff]
    %v143 = vld [vmem:[#allocation3 + $0x10] sm:$0xff]
    %v144 = vld [vmem:[#allocation3 + $0x18] sm:$0xff]
    %v145 = vld [vmem:[#allocation3 + $0x20] sm:$0xff]
    %v146 = vld [vmem:[#allocation3 + $0x28] sm:$0xff]
    %v147 = vld [vmem:[#allocation3 + $0x30] sm:$0xff]
    %v148 = vld [vmem:[#allocation3 + $0x38] sm:$0xff]
    %v149 = vadd.f32 %v77, %v101
    %v150 = vadd.f32 %v78, %v102
    %v151 = vadd.f32 %v79, %v103
    %v152 = vadd.f32 %v80, %v104
    %v153 = vadd.f32 %v81, %v105
    %v154 = vadd.f32 %v82, %v106
    %v155 = vadd.f32 %v83, %v107
    %v156 = vadd.f32 %v84, %v108
    %v157 = vadd.f32 %v141, %v149
    %v158 = vadd.f32 %v142, %v150
    %v159 = vadd.f32 %v143, %v151
    %v160 = vadd.f32 %v144, %v152
    %v161 = vadd.f32 %v145, %v153
    %v162 = vadd.f32 %v146, %v154
    %v163 = vadd.f32 %v147, %v155
    %v164 = vadd.f32 %v148, %v156
    %165 = vst [vmem:[#allocation3] sm:$0xff] %v157
    %166 = vst [vmem:[#allocation3 + $0x8] sm:$0xff] %v158
    %167 = vst [vmem:[#allocation3 + $0x10] sm:$0xff] %v159
    %168 = vst [vmem:[#allocation3 + $0x18] sm:$0xff] %v160
    %169 = vst [vmem:[#allocation3 + $0x20] sm:$0xff] %v161
    %170 = vst [vmem:[#allocation3 + $0x28] sm:$0xff] %v162
    %171 = vst [vmem:[#allocation3 + $0x30] sm:$0xff] %v163
    %172 = vst [vmem:[#allocation3 + $0x38] sm:$0xff] %v164
    // Predicated region
    $region22: #{tpu_custom_call.1} parent=1 // pred_check
      %p173 = pneg %p39
    $region23: #{tpu_custom_call.1} parent=1 // pred_check_branch
      %175 = sbr.rel (%p173) target = $region25
    $region24: #{tpu_custom_call.1} parent=1 // pred_region
      %v176 = vld [vmem:[#allocation2] sm:$0xff]
      %v177 = vld [vmem:[#allocation2 + $0x8] sm:$0xff]
      %v178 = vld [vmem:[#allocation2 + $0x10] sm:$0xff]
      %v179 = vld [vmem:[#allocation2 + $0x18] sm:$0xff]
      %v180 = vld [vmem:[#allocation2 + $0x20] sm:$0xff]
      %v181 = vld [vmem:[#allocation2 + $0x28] sm:$0xff]
      %v182 = vld [vmem:[#allocation2 + $0x30] sm:$0xff]
      %v183 = vld [vmem:[#allocation2 + $0x38] sm:$0xff]
      %v184 = vrot.slane %v176, 4
      %v185 = vadd.f32 %v176, %v184
      %v186 = vrot.slane %v185, 2
      %v187 = vadd.f32 %v185, %v186
      %v188 = vrot.slane %v187, 1
      %v189 = vadd.f32 %v187, %v188
      %v190 = vrot.slane %v177, 4
      %v191 = vadd.f32 %v177, %v190
      %v192 = vrot.slane %v191, 2
      %v193 = vadd.f32 %v191, %v192
      %v194 = vrot.slane %v193, 1
      %v195 = vadd.f32 %v193, %v194
      %v196 = vrot.slane %v178, 4
      %v197 = vadd.f32 %v178, %v196
      %v198 = vrot.slane %v197, 2
      %v199 = vadd.f32 %v197, %v198
      %v200 = vrot.slane %v199, 1
      %v201 = vadd.f32 %v199, %v200
      %v202 = vrot.slane %v179, 4
      %v203 = vadd.f32 %v179, %v202
      %v204 = vrot.slane %v203, 2
      %v205 = vadd.f32 %v203, %v204
      %v206 = vrot.slane %v205, 1
      %v207 = vadd.f32 %v205, %v206
      %v208 = vrot.slane %v180, 4
      %v209 = vadd.f32 %v180, %v208
      %v210 = vrot.slane %v209, 2
      %v211 = vadd.f32 %v209, %v210
      %v212 = vrot.slane %v211, 1
      %v213 = vadd.f32 %v211, %v212
      %v214 = vrot.slane %v181, 4
      %v215 = vadd.f32 %v181, %v214
      %v216 = vrot.slane %v215, 2
      %v217 = vadd.f32 %v215, %v216
      %v218 = vrot.slane %v217, 1
      %v219 = vadd.f32 %v217, %v218
      %v220 = vrot.slane %v182, 4
      %v221 = vadd.f32 %v182, %v220
      %v222 = vrot.slane %v221, 2
      %v223 = vadd.f32 %v221, %v222
      %v224 = vrot.slane %v223, 1
      %v225 = vadd.f32 %v223, %v224
      %v226 = vrot.slane %v183, 4
      %v227 = vadd.f32 %v183, %v226
      %v228 = vrot.slane %v227, 2
      %v229 = vadd.f32 %v227, %v228
      %v230 = vrot.slane %v229, 1
      %v231 = vadd.f32 %v229, %v230
      %vm240 = vcmask 1041409
      %v241 = vsel %vm240, %v195, %v189
      %vm242 = vcmask 1042434
      %v243 = vsel %vm242, %v201, %v241
      %vm244 = vcmask 1043459
      %v245 = vsel %vm244, %v207, %v243
      %vm246 = vcmask 1044484
      %v247 = vsel %vm246, %v213, %v245
      %vm248 = vcmask 1045509
      %v249 = vsel %vm248, %v219, %v247
      %vm250 = vcmask 1046534
      %v251 = vsel %vm250, %v225, %v249
      %vm252 = vcmask 1047559
      %v253 = vsel %vm252, %v231, %v251
      %255 = vst [vmem:[#allocation9] sm:$0xff] %v253
      %v256 = vld [vmem:[#allocation3] sm:$0xff]
      %v257 = vld [vmem:[#allocation3 + $0x8] sm:$0xff]
      %v258 = vld [vmem:[#allocation3 + $0x10] sm:$0xff]
      %v259 = vld [vmem:[#allocation3 + $0x18] sm:$0xff]
      %v260 = vld [vmem:[#allocation3 + $0x20] sm:$0xff]
      %v261 = vld [vmem:[#allocation3 + $0x28] sm:$0xff]
      %v262 = vld [vmem:[#allocation3 + $0x30] sm:$0xff]
      %v263 = vld [vmem:[#allocation3 + $0x38] sm:$0xff]
      %v264 = vrot.slane %v256, 4
      %v265 = vadd.f32 %v256, %v264
      %v266 = vrot.slane %v265, 2
      %v267 = vadd.f32 %v265, %v266
      %v268 = vrot.slane %v267, 1
      %v269 = vadd.f32 %v267, %v268
      %v270 = vrot.slane %v257, 4
      %v271 = vadd.f32 %v257, %v270
      %v272 = vrot.slane %v271, 2
      %v273 = vadd.f32 %v271, %v272
      %v274 = vrot.slane %v273, 1
      %v275 = vadd.f32 %v273, %v274
      %v276 = vrot.slane %v258, 4
      %v277 = vadd.f32 %v258, %v276
      %v278 = vrot.slane %v277, 2
      %v279 = vadd.f32 %v277, %v278
      %v280 = vrot.slane %v279, 1
      %v281 = vadd.f32 %v279, %v280
      %v282 = vrot.slane %v259, 4
      %v283 = vadd.f32 %v259, %v282
      %v284 = vrot.slane %v283, 2
      %v285 = vadd.f32 %v283, %v284
      %v286 = vrot.slane %v285, 1
      %v287 = vadd.f32 %v285, %v286
      %v288 = vrot.slane %v260, 4
      %v289 = vadd.f32 %v260, %v288
      %v290 = vrot.slane %v289, 2
      %v291 = vadd.f32 %v289, %v290
      %v292 = vrot.slane %v291, 1
      %v293 = vadd.f32 %v291, %v292
      %v294 = vrot.slane %v261, 4
      %v295 = vadd.f32 %v261, %v294
      %v296 = vrot.slane %v295, 2
      %v297 = vadd.f32 %v295, %v296
      %v298 = vrot.slane %v297, 1
      %v299 = vadd.f32 %v297, %v298
      %v300 = vrot.slane %v262, 4
      %v301 = vadd.f32 %v262, %v300
      %v302 = vrot.slane %v301, 2
      %v303 = vadd.f32 %v301, %v302
      %v304 = vrot.slane %v303, 1
      %v305 = vadd.f32 %v303, %v304
      %v306 = vrot.slane %v263, 4
      %v307 = vadd.f32 %v263, %v306
      %v308 = vrot.slane %v307, 2
      %v309 = vadd.f32 %v307, %v308
      %v310 = vrot.slane %v309, 1
      %v311 = vadd.f32 %v309, %v310
      %v320 = vsel %vm240, %v275, %v269
      %v321 = vsel %vm242, %v281, %v320
      %v322 = vsel %vm244, %v287, %v321
      %v323 = vsel %vm246, %v293, %v322
      %v324 = vsel %vm248, %v299, %v323
      %v325 = vsel %vm250, %v305, %v324
      %v326 = vsel %vm252, %v311, %v325
      %328 = vst [vmem:[#allocation10] sm:$0xff] %v326
    $region25: #{tpu_custom_call.1} parent=1 // pred_fallthru
      _
    // Predicated region
    $region26: #{tpu_custom_call.1} parent=1 // pred_check
      _
    $region27: #{tpu_custom_call.1} parent=1 // pred_check_branch
      %330 = sbr.rel (0) target = $region29
    $region28: #{tpu_custom_call.1} parent=1 // pred_region
      %s332 = ssub.s32 128, 128
      %333 = vsyncadd [#allocation6], %s332
      %s335 = sshll.u32 [#allocation9], 4
      %s336 = int_to_ptr.vmem [resolvable:$true] %s335
      %338 = dma.vmem_to_hbm [thread:$0]  %s336, 128, %s2, [#allocation6]
    $region29: #{tpu_custom_call.1} parent=1 // pred_fallthru
      _
    // Predicated region
    $region30: #{tpu_custom_call.1} parent=1 // pred_check
      _
    $region31: #{tpu_custom_call.1} parent=1 // pred_check_branch
      %340 = sbr.rel (0) target = $region33
    $region32: #{tpu_custom_call.1} parent=1 // pred_region
      %s342 = ssub.s32 128, 128
      %343 = vsyncadd [#allocation11], %s342
      %s345 = sshll.u32 [#allocation10], 4
      %s346 = int_to_ptr.vmem [resolvable:$true] %s345
      %348 = dma.vmem_to_hbm [thread:$0]  %s346, 128, %s3, [#allocation11]
    $region33: #{tpu_custom_call.1} parent=1 // pred_fallthru
      _
    // Predicated region
    $region34: #{tpu_custom_call.1} parent=1 // pred_check
      _
    $region35: #{tpu_custom_call.1} parent=1 // pred_check_branch
      %350 = sbr.rel (0) target = $region37
    $region36: #{tpu_custom_call.1} parent=1 // pred_region
      %351 = dma.done [#allocation6], 128
    $region37: #{tpu_custom_call.1} parent=1 // pred_fallthru
      _
    // Predicated region
    $region38: #{tpu_custom_call.1} parent=1 // pred_check
      _
    $region39: #{tpu_custom_call.1} parent=1 // pred_check_branch
      %353 = sbr.rel (0) target = $region41
    $region40: #{tpu_custom_call.1} parent=1 // pred_region
      %354 = dma.done [#allocation11], 128
    $region41: #{tpu_custom_call.1} parent=1 // pred_fallthru
      _
    %355 = vsyncpa [#allocation5], 1
    %356 = vsyncpa [#allocation8], 1
    %357 = vsyncpa [#allocation6], 1
    %358 = vsyncpa [#allocation11], 1

</llo_original>
